<compile_context>
chip_gen: v7x
topology: tpu7x:2x2x1
jax: 0.10.0
libtpu: 0.0.40
codegen_flags: <defaults>
</compile_context>

<pallas_src>
import jax
import jax.numpy as jnp
from jax.experimental import pallas as pl
from jax.experimental.pallas import tpu as pltpu

IN_DIM = 100
LATENT_DIM = 16
PAD = 128            # lane width; every feature dim is padded to this
ONE_LANE = PAD - 1   # constant-1 lane carrying the folded bias
MAX_TILE_B = 1024
BATCH = 8

# (in_features, out_features) for the 6 Linear layers, ReLU flag after each.
LAYER_DIMS = [
    (IN_DIM, 64), (64, 32), (32, LATENT_DIM),        # encoder
    (LATENT_DIM, 32), (32, 64), (64, IN_DIM),        # decoder
]
RELU_AFTER = (True, True, False, True, True, False)


def _round_up(n, m):
    return ((n + m - 1) // m) * m


def _autoencoder_kernel(x_ref, w_ref, out_ref):
    # x_ref:   (TILE_B, 128) bf16   padded activations, lane 127 == 1.0
    # w_ref:   (6, 128, 128) bf16   packed weights, bias folded into row 127
    # out_ref: (TILE_B, 128) f32
    h = x_ref[...]
    for i in range(6):  # static unroll — 6 fused MXU matmuls, f32 accumulation
        acc = jnp.dot(h, w_ref[i], preferred_element_type=jnp.float32)
        if RELU_AFTER[i]:
            acc = jnp.maximum(acc, 0.0)
        if i < 5:
            h = acc.astype(jnp.bfloat16)
        else:
            out_ref[...] = acc.astype(out_ref.dtype)


def init_params(key, latent_dim=LATENT_DIM):
    """Deterministic init matching PyTorch nn.Linear default scale.

    Weights stored as (in, out) so y = x @ W + b  ==  x @ W_pt.T + b.
    Returns a list of (w, b) pairs at their natural (unpadded) shapes.
    """
    del latent_dim  # fixed by LAYER_DIMS
    params = []
    for i, (d_in, d_out) in enumerate(LAYER_DIMS):
        kw, kb = jax.random.split(jax.random.fold_in(key, i))
        bound = 1.0 / (d_in ** 0.5)
        w = jax.random.uniform(kw, (d_in, d_out), jnp.float32, -bound, bound)
        b = jax.random.uniform(kb, (d_out,), jnp.float32, -bound, bound)
        params.append((w, b))
    return params


def pack_params(params):
    """Pack all 6 layers into one bf16 (6, 128, 128) slab, bias folded in.

    Row 127 of each layer's weight matrix holds the bias, and W[127,127] = 1 so
    the constant-1 lane of the activations survives into the next layer.
    Call once at init; the result is tile-size independent.
    """
    w_slab = jnp.zeros((6, PAD, PAD), jnp.float32)
    for i, (w, b) in enumerate(params):
        d_in, d_out = w.shape
        w_slab = w_slab.at[i, :d_in, :d_out].set(w)
        w_slab = w_slab.at[i, ONE_LANE, :d_out].set(b)      # folded bias
        w_slab = w_slab.at[i, ONE_LANE, ONE_LANE].set(1.0)  # keep 1-lane alive
    return w_slab.astype(jnp.bfloat16)


def _pick_tile(batch):
    """Batch-tile size: 2 even tiles for medium batches (dual-TC on v7x),
    1024-row tiles for large batches, one tiny tile for very small ones."""
    b8 = _round_up(batch, 8)
    if b8 <= 8:
        return 8
    if b8 <= 2 * MAX_TILE_B:
        return _round_up(b8 // 2, 8)   # exactly 2 tiles
    return MAX_TILE_B


def autoencoder_forward(x, w_slab, tile_b=None):
    B = x.shape[0]
    if tile_b is None:
        tile_b = _pick_tile(B)
    B_pad = _round_up(B, tile_b)

    # Lane-dense bf16 input slab [B_pad, 128]; lane 127 is the constant-1
    # bias lane, lanes 100..126 and padded batch rows are zero.
    xb = x.astype(jnp.bfloat16)
    x_pad = jnp.pad(xb, ((0, B_pad - B), (0, PAD - 1 - IN_DIM)))
    x_pad = jnp.concatenate(
        [x_pad, jnp.ones((B_pad, 1), jnp.bfloat16)], axis=1)

    grid = (B_pad // tile_b,)
    out_pad = pl.pallas_call(
        _autoencoder_kernel,
        out_shape=jax.ShapeDtypeStruct((B_pad, PAD), jnp.float32),
        grid=grid,
        in_specs=[
            pl.BlockSpec((tile_b, PAD), lambda i: (i, 0)),     # x tile (streamed)
            pl.BlockSpec((6, PAD, PAD), lambda i: (0, 0, 0)),  # weights (resident)
        ],
        out_specs=pl.BlockSpec((tile_b, PAD), lambda i: (i, 0)),
        compiler_params=pltpu.CompilerParams(
            dimension_semantics=("parallel",)),                # dual-TC on v7x
    )(x_pad, w_slab)

    return out_pad[:B, :IN_DIM]


def reference_forward(x, params):
    h = x
    for (w, b), do_relu in zip(params, RELU_AFTER):
        h = h @ w + b
        if do_relu:
            h = jnp.maximum(h, 0.0)
    return h


if __name__ == "__main__":
    key = jax.random.PRNGKey(0)
    k_x, k_p = jax.random.split(key)
    params = init_params(k_p, LATENT_DIM)
    w_slab = pack_params(params)   # packed once, reused for every forward

    # Small batch (single tile).
    x = jax.random.normal(k_x, (BATCH, IN_DIM), dtype=jnp.float32)
    out = autoencoder_forward(x, w_slab)
    jax.block_until_ready(out)
    ref = reference_forward(x, params)
    assert out.shape == (BATCH, IN_DIM)
    assert jnp.allclose(out, ref, atol=5e-2, rtol=5e-2), float(
        jnp.max(jnp.abs(out - ref)))

    # Medium batch (2-tile grid path with padding) — exercises the tiler.
    x2 = jax.random.normal(jax.random.fold_in(k_x, 1), (300, IN_DIM),
                           dtype=jnp.float32)
    out2 = autoencoder_forward(x2, w_slab)
    jax.block_until_ready(out2)
    ref2 = reference_forward(x2, params)
    assert out2.shape == (300, IN_DIM)
    assert jnp.allclose(out2, ref2, atol=5e-2, rtol=5e-2), float(
        jnp.max(jnp.abs(out2 - ref2)))

    print("KERNEL_OK")
</pallas_src>

<mosaic_0001>
module attributes {stable_mosaic.version = 11 : i64} {
  func.func @_autoencoder_kernel(%arg0: i32, %arg1: memref<8x128xbf16, #tpu.memory_space<vmem>>, %arg2: memref<6x128x128xbf16, #tpu.memory_space<vmem>>, %arg3: memref<8x128xf32, #tpu.memory_space<vmem>>) attributes {dimension_semantics = [#tpu.dimension_semantics<parallel>], iteration_bounds = array<i64: 1>, scalar_prefetch = 0 : i64, scratch_operands = 0 : i64, tpu.core_type = #tpu.core_type<tc>, window_params = [{transform_indices = @transform_0, window_bounds = array<i64: 8, 128>}, {pipeline_mode = #tpu.pipeline_mode<synchronous>, transform_indices = @transform_1, window_bounds = array<i64: 6, 128, 128>}, {transform_indices = @transform_2, window_bounds = array<i64: 8, 128>}]} {
    %c0 = arith.constant 0 : index
    %c0_0 = arith.constant 0 : index
    %0 = vector.load %arg1[%c0, %c0_0] : memref<8x128xbf16, #tpu.memory_space<vmem>>, vector<8x128xbf16>
    %c0_1 = arith.constant 0 : index
    %c0_2 = arith.constant 0 : index
    %c0_3 = arith.constant 0 : index
    %1 = vector.load %arg2[%c0_1, %c0_2, %c0_3] : memref<6x128x128xbf16, #tpu.memory_space<vmem>>, vector<1x128x128xbf16>
    %2 = vector.shape_cast %1 : vector<1x128x128xbf16> to vector<128x128xbf16>
    %cst = arith.constant dense<0.000000e+00> : vector<8x128xf32>
    %3 = tpu.matmul %0, %2, %cst {dimension_numbers = #tpu.dot_dimension_numbers<[1], [0], [0], [1], [0, 0, 1, 1], [], []>} : vector<8x128xbf16>, vector<128x128xbf16>, vector<8x128xf32> -> vector<8x128xf32>
    %cst_4 = arith.constant 0.000000e+00 : f32
    %4 = vector.broadcast %cst_4 : f32 to vector<8x128xf32>
    %5 = arith.maximumf %3, %4 : vector<8x128xf32>
    %6 = arith.truncf %5 : vector<8x128xf32> to vector<8x128xbf16>
    %c1 = arith.constant 1 : index
    %c0_5 = arith.constant 0 : index
    %c0_6 = arith.constant 0 : index
    %7 = vector.load %arg2[%c1, %c0_5, %c0_6] : memref<6x128x128xbf16, #tpu.memory_space<vmem>>, vector<1x128x128xbf16>
    %8 = vector.shape_cast %7 : vector<1x128x128xbf16> to vector<128x128xbf16>
    %cst_7 = arith.constant dense<0.000000e+00> : vector<8x128xf32>
    %9 = tpu.matmul %6, %8, %cst_7 {dimension_numbers = #tpu.dot_dimension_numbers<[1], [0], [0], [1], [0, 0, 1, 1], [], []>} : vector<8x128xbf16>, vector<128x128xbf16>, vector<8x128xf32> -> vector<8x128xf32>
    %cst_8 = arith.constant 0.000000e+00 : f32
    %10 = vector.broadcast %cst_8 : f32 to vector<8x128xf32>
    %11 = arith.maximumf %9, %10 : vector<8x128xf32>
    %12 = arith.truncf %11 : vector<8x128xf32> to vector<8x128xbf16>
    %c2 = arith.constant 2 : index
    %c0_9 = arith.constant 0 : index
    %c0_10 = arith.constant 0 : index
    %13 = vector.load %arg2[%c2, %c0_9, %c0_10] : memref<6x128x128xbf16, #tpu.memory_space<vmem>>, vector<1x128x128xbf16>
    %14 = vector.shape_cast %13 : vector<1x128x128xbf16> to vector<128x128xbf16>
    %cst_11 = arith.constant dense<0.000000e+00> : vector<8x128xf32>
    %15 = tpu.matmul %12, %14, %cst_11 {dimension_numbers = #tpu.dot_dimension_numbers<[1], [0], [0], [1], [0, 0, 1, 1], [], []>} : vector<8x128xbf16>, vector<128x128xbf16>, vector<8x128xf32> -> vector<8x128xf32>
    %16 = arith.truncf %15 : vector<8x128xf32> to vector<8x128xbf16>
    %c3 = arith.constant 3 : index
    %c0_12 = arith.constant 0 : index
    %c0_13 = arith.constant 0 : index
    %17 = vector.load %arg2[%c3, %c0_12, %c0_13] : memref<6x128x128xbf16, #tpu.memory_space<vmem>>, vector<1x128x128xbf16>
    %18 = vector.shape_cast %17 : vector<1x128x128xbf16> to vector<128x128xbf16>
    %cst_14 = arith.constant dense<0.000000e+00> : vector<8x128xf32>
    %19 = tpu.matmul %16, %18, %cst_14 {dimension_numbers = #tpu.dot_dimension_numbers<[1], [0], [0], [1], [0, 0, 1, 1], [], []>} : vector<8x128xbf16>, vector<128x128xbf16>, vector<8x128xf32> -> vector<8x128xf32>
    %cst_15 = arith.constant 0.000000e+00 : f32
    %20 = vector.broadcast %cst_15 : f32 to vector<8x128xf32>
    %21 = arith.maximumf %19, %20 : vector<8x128xf32>
    %22 = arith.truncf %21 : vector<8x128xf32> to vector<8x128xbf16>
    %c4 = arith.constant 4 : index
    %c0_16 = arith.constant 0 : index
    %c0_17 = arith.constant 0 : index
    %23 = vector.load %arg2[%c4, %c0_16, %c0_17] : memref<6x128x128xbf16, #tpu.memory_space<vmem>>, vector<1x128x128xbf16>
    %24 = vector.shape_cast %23 : vector<1x128x128xbf16> to vector<128x128xbf16>
    %cst_18 = arith.constant dense<0.000000e+00> : vector<8x128xf32>
    %25 = tpu.matmul %22, %24, %cst_18 {dimension_numbers = #tpu.dot_dimension_numbers<[1], [0], [0], [1], [0, 0, 1, 1], [], []>} : vector<8x128xbf16>, vector<128x128xbf16>, vector<8x128xf32> -> vector<8x128xf32>
    %cst_19 = arith.constant 0.000000e+00 : f32
    %26 = vector.broadcast %cst_19 : f32 to vector<8x128xf32>
    %27 = arith.maximumf %25, %26 : vector<8x128xf32>
    %28 = arith.truncf %27 : vector<8x128xf32> to vector<8x128xbf16>
    %c5 = arith.constant 5 : index
    %c0_20 = arith.constant 0 : index
    %c0_21 = arith.constant 0 : index
    %29 = vector.load %arg2[%c5, %c0_20, %c0_21] : memref<6x128x128xbf16, #tpu.memory_space<vmem>>, vector<1x128x128xbf16>
    %30 = vector.shape_cast %29 : vector<1x128x128xbf16> to vector<128x128xbf16>
    %cst_22 = arith.constant dense<0.000000e+00> : vector<8x128xf32>
    %31 = tpu.matmul %28, %30, %cst_22 {dimension_numbers = #tpu.dot_dimension_numbers<[1], [0], [0], [1], [0, 0, 1, 1], [], []>} : vector<8x128xbf16>, vector<128x128xbf16>, vector<8x128xf32> -> vector<8x128xf32>
    %c0_23 = arith.constant 0 : index
    %c0_24 = arith.constant 0 : index
    %32 = vector.load %arg3[%c0_23, %c0_24] : memref<8x128xf32, #tpu.memory_space<vmem>>, vector<8x128xf32>
    tpu.vector_store %arg3[%c0_23, %c0_24], %31 {strides = array<i32>} : memref<8x128xf32, #tpu.memory_space<vmem>>, vector<8x128xf32>,
    return
  }
  func.func @transform_0(%arg0: i32) -> (i32, i32) {
    %c0_i32 = arith.constant 0 : i32
    %c0_i32_0 = arith.constant 0 : i32
    return %arg0, %c0_i32 : i32, i32
  }
  func.func @transform_1(%arg0: i32) -> (i32, i32, i32) {
    %c0_i32 = arith.constant 0 : i32
    %c0_i32_0 = arith.constant 0 : i32
    %c0_i32_1 = arith.constant 0 : i32
    %c0_i32_2 = arith.constant 0 : i32
    return %c0_i32, %c0_i32_0, %c0_i32_1 : i32, i32, i32
  }
  func.func @transform_2(%arg0: i32) -> (i32, i32) {
    %c0_i32 = arith.constant 0 : i32
    %c0_i32_0 = arith.constant 0 : i32
    return %arg0, %c0_i32 : i32, i32
  }
}

</mosaic_0001>

<llo_original>
// kernel: tpu_custom_call.1
$region0: #{tpu_custom_call.1}
  #allocation0 [shape = 'u32[]', space=smem, size = 0x4, offset = 0x4, fixed_abs, tag = 'smem constant byte address 0x4 - core index']
  #allocation1 [shape = 'u32[144,128]{1,0:T(1,128)}', space=vmem, size = 0x12000, scoped, tag = 'internal scratch']
  %s0 = inlined_call_operand.hbm [shape: bf16[8,128], index: 0, kind: input, shape index: {}]
  %s1 = inlined_call_operand.hbm [shape: bf16[6,128,128], index: 1, kind: input, shape index: {}]
  %s2 = inlined_call_operand.hbm [shape: f32[8,128], index: 2, kind: output, shape index: {}]
  %s3 = sld [smem:[#allocation0]]
  $region26: #{tpu_custom_call.1} parent=0
    _
  %s5 = ssub.s32 1, %s3
  %s6 = scalar_select 0, %s5, %s3
  $region1: #{tpu_custom_call.1} parent=0
    #allocation2 [shape = 'u8[2048]{0}', space=vmem, size = 0x800, scoped, tag = 'input window, operand 0, single buffered']
    #allocation3 [shape = 's32[1]{0}', space=sflag, size = 0x4, scoped, tag = 'scoped memory for tpu_custom_call.1']
    #allocation4 [shape = 's32[1]{0}', space=sflag, size = 0x4, scoped, tag = 'scoped memory for tpu_custom_call.1']
    #allocation5 [shape = 'u8[196608]{0}', space=vmem, size = 0x30000, scoped, tag = 'input window, operand 1, single buffered']
    #allocation6 [shape = 's32[1]{0}', space=sflag, size = 0x4, scoped, tag = 'scoped memory for tpu_custom_call.1']
    #allocation7 [shape = 'u8[4096]{0}', space=vmem, size = 0x1000, scoped, tag = 'output window, operand 0, single buffered']
    %7 = vsyncpa [#allocation3], 0
    %8 = vsyncpa [#allocation6], 0
    %9 = vsyncpa [#allocation4], 0
    // Predicated region
    $region2: #{tpu_custom_call.1} parent=1 // pred_check
      _
    $region3: #{tpu_custom_call.1} parent=1 // pred_check_branch
      %11 = sbr.rel (0) target = $region5
    $region4: #{tpu_custom_call.1} parent=1 // pred_region
      %s13 = ssub.s32 64, 64
      %14 = vsyncadd [#allocation3], %s13
      %s16 = sshll.u32 [#allocation2], 4
      %s17 = int_to_ptr.vmem [resolvable:$true] %s16
      %19 = dma.hbm_to_vmem [thread:$0]  %s0, 64, %s17, [#allocation3]
    $region5: #{tpu_custom_call.1} parent=1 // pred_fallthru
      _
    // Predicated region
    $region6: #{tpu_custom_call.1} parent=1 // pred_check
      _
    $region7: #{tpu_custom_call.1} parent=1 // pred_check_branch
      %21 = sbr.rel (0) target = $region9
    $region8: #{tpu_custom_call.1} parent=1 // pred_region
      %s23 = ssub.s32 6144, 6144
      %24 = vsyncadd [#allocation6], %s23
      %s25 = sshll.u32 [#allocation5], 4
      %s26 = int_to_ptr.vmem [resolvable:$true] %s25
      %31 = dma.hbm_to_vmem [thread:$0]  %s1, 6144, %s26, [#allocation6], 64, 64, 4
    $region9: #{tpu_custom_call.1} parent=1 // pred_fallthru
      _
    // Predicated region
    $region10: #{tpu_custom_call.1} parent=1 // pred_check
      _
    $region11: #{tpu_custom_call.1} parent=1 // pred_check_branch
      %33 = sbr.rel (0) target = $region13
    $region12: #{tpu_custom_call.1} parent=1 // pred_region
      %34 = dma.done [#allocation3], 64
    $region13: #{tpu_custom_call.1} parent=1 // pred_fallthru
      _
    // Predicated region
    $region14: #{tpu_custom_call.1} parent=1 // pred_check
      _
    $region15: #{tpu_custom_call.1} parent=1 // pred_check_branch
      %36 = sbr.rel (0) target = $region17
    $region16: #{tpu_custom_call.1} parent=1 // pred_region
      %37 = dma.done [#allocation6], 6144
    $region17: #{tpu_custom_call.1} parent=1 // pred_fallthru
      _
    %v39 = vld [vmem:[#allocation2] sm:$0xf]
    %v40 = vld [vmem:[#allocation5] sm:$0xf]
    %v41 = vld [vmem:[#allocation5 + $0x4] sm:$0xf]
    %v42 = vld [vmem:[#allocation5 + $0x8] sm:$0xf]
    %v43 = vld [vmem:[#allocation5 + $0xc] sm:$0xf]
    %v44 = vld [vmem:[#allocation5 + $0x10] sm:$0xf]
    %v45 = vld [vmem:[#allocation5 + $0x14] sm:$0xf]
    %v46 = vld [vmem:[#allocation5 + $0x18] sm:$0xf]
    %v47 = vld [vmem:[#allocation5 + $0x1c] sm:$0xf]
    %v48 = vld [vmem:[#allocation5 + $0x20] sm:$0xf]
    %v49 = vld [vmem:[#allocation5 + $0x24] sm:$0xf]
    %v50 = vld [vmem:[#allocation5 + $0x28] sm:$0xf]
    %v51 = vld [vmem:[#allocation5 + $0x2c] sm:$0xf]
    %v52 = vld [vmem:[#allocation5 + $0x30] sm:$0xf]
    %v53 = vld [vmem:[#allocation5 + $0x34] sm:$0xf]
    %v54 = vld [vmem:[#allocation5 + $0x38] sm:$0xf]
    %v55 = vld [vmem:[#allocation5 + $0x3c] sm:$0xf]
    %v72 = vunpack.c.l.b16 %v40
    %v73 = vunpack.c.l.b16 %v41
    %v74 = vunpack.c.l.b16 %v42
    %v75 = vunpack.c.l.b16 %v43
    %v76 = vunpack.c.l.b16 %v44
    %v77 = vunpack.c.l.b16 %v45
    %v78 = vunpack.c.l.b16 %v46
    %v79 = vunpack.c.l.b16 %v47
    %v80 = vunpack.c.l.b16 %v48
    %v81 = vunpack.c.l.b16 %v49
    %v82 = vunpack.c.l.b16 %v50
    %v83 = vunpack.c.l.b16 %v51
    %v84 = vunpack.c.l.b16 %v52
    %v85 = vunpack.c.l.b16 %v53
    %v86 = vunpack.c.l.b16 %v54
    %v87 = vunpack.c.l.b16 %v55
    %v88 = vpack.c.b16 %v73, %v72
    %v89 = vpack.c.b16 %v75, %v74
    %v90 = vpack.c.b16 %v77, %v76
    %v91 = vpack.c.b16 %v79, %v78
    %v92 = vpack.c.b16 %v81, %v80
    %v93 = vpack.c.b16 %v83, %v82
    %v94 = vpack.c.b16 %v85, %v84
    %v95 = vpack.c.b16 %v87, %v86
    %104 = vmatprep.subr.bf16.mxu0 0
    %105 = vmatpush1.bf16.msra.mxu0 %v88
    %106 = vmatprep.subr.bf16.mxu0 0
    %107 = vmatpush1.bf16.msra.mxu0 %v89
    %108 = vmatprep.subr.bf16.mxu0 0
    %109 = vmatpush1.bf16.msra.mxu0 %v90
    %110 = vmatprep.subr.bf16.mxu0 0
    %111 = vmatpush1.bf16.msra.mxu0 %v91
    %112 = vmatprep.subr.bf16.mxu0 0
    %113 = vmatpush1.bf16.msra.mxu0 %v92
    %114 = vmatprep.subr.bf16.mxu0 0
    %115 = vmatpush1.bf16.msra.mxu0 %v93
    %116 = vmatprep.subr.bf16.mxu0 0
    %117 = vmatpush1.bf16.msra.mxu0 %v94
    %118 = vmatprep.subr.bf16.mxu0 0
    %119 = vmatpush1.bf16.msra.mxu0 %v95
    %120 = vmatprep.subr.bf16.mxu0 0
    %121 = vmatpush1.bf16.msra.mxu0 0
    %122 = vmatprep.subr.bf16.mxu0 0
    %123 = vmatpush1.bf16.msra.mxu0 0
    %124 = vmatprep.subr.bf16.mxu0 0
    %125 = vmatpush1.bf16.msra.mxu0 0
    %126 = vmatprep.subr.bf16.mxu0 0
    %127 = vmatpush1.bf16.msra.mxu0 0
    %128 = vmatprep.subr.bf16.mxu0 0
    %129 = vmatpush1.bf16.msra.mxu0 0
    %130 = vmatprep.subr.bf16.mxu0 0
    %131 = vmatpush1.bf16.msra.mxu0 0
    %132 = vmatprep.subr.bf16.mxu0 0
    %133 = vmatpush1.bf16.msra.mxu0 0
    %134 = vmatprep.subr.bf16.mxu0 0
    %135 = vmatpush1.bf16.msra.mxu0 0
    %136 = vmatprep.mubr.bf16.mxu0 0
    %137 = vmatmul.mubr.bf16.gmra.mrb[0].mxu0 %v39
    %v138 = vpop.f32.mrb[0].mxu0
    %v139 = vadd.f32 0.0, %v138
    %v140 = vpop.f32.mrb[0].mxu0
    %v141 = vpop.f32.mrb[0].mxu0
    %v142 = vpop.f32.mrb[0].mxu0
    %143 = vdwg.mxu0
    %v144 = vmax.f32 %v139, 0.0
    %v145 = vpack.c.bf16 %v144, %v144
    %s146 = scalar_lea.vmem [#allocation5], 64
    %v147 = vld [vmem:[%s146] sm:$0xf]
    %v148 = vld [vmem:[%s146 + $0x4] sm:$0xf]
    %v149 = vld [vmem:[%s146 + $0x8] sm:$0xf]
    %v150 = vld [vmem:[%s146 + $0xc] sm:$0xf]
    %v151 = vld [vmem:[%s146 + $0x10] sm:$0xf]
    %v152 = vld [vmem:[%s146 + $0x14] sm:$0xf]
    %v153 = vld [vmem:[%s146 + $0x18] sm:$0xf]
    %v154 = vld [vmem:[%s146 + $0x1c] sm:$0xf]
    %v155 = vld [vmem:[%s146 + $0x20] sm:$0xf]
    %v156 = vld [vmem:[%s146 + $0x24] sm:$0xf]
    %v157 = vld [vmem:[%s146 + $0x28] sm:$0xf]
    %v158 = vld [vmem:[%s146 + $0x2c] sm:$0xf]
    %v159 = vld [vmem:[%s146 + $0x30] sm:$0xf]
    %v160 = vld [vmem:[%s146 + $0x34] sm:$0xf]
    %v161 = vld [vmem:[%s146 + $0x38] sm:$0xf]
    %v162 = vld [vmem:[%s146 + $0x3c] sm:$0xf]
    %v179 = vunpack.c.l.b16 %v147
    %v180 = vunpack.c.l.b16 %v148
    %v181 = vunpack.c.l.b16 %v149
    %v182 = vunpack.c.l.b16 %v150
    %v183 = vunpack.c.l.b16 %v151
    %v184 = vunpack.c.l.b16 %v152
    %v185 = vunpack.c.l.b16 %v153
    %v186 = vunpack.c.l.b16 %v154
    %v187 = vunpack.c.l.b16 %v155
    %v188 = vunpack.c.l.b16 %v156
    %v189 = vunpack.c.l.b16 %v157
    %v190 = vunpack.c.l.b16 %v158
    %v191 = vunpack.c.l.b16 %v159
    %v192 = vunpack.c.l.b16 %v160
    %v193 = vunpack.c.l.b16 %v161
    %v194 = vunpack.c.l.b16 %v162
    %v195 = vpack.c.b16 %v180, %v179
    %v196 = vpack.c.b16 %v182, %v181
    %v197 = vpack.c.b16 %v184, %v183
    %v198 = vpack.c.b16 %v186, %v185
    %v199 = vpack.c.b16 %v188, %v187
    %v200 = vpack.c.b16 %v190, %v189
    %v201 = vpack.c.b16 %v192, %v191
    %v202 = vpack.c.b16 %v194, %v193
    %211 = vmatprep.subr.bf16.mxu0 0
    %212 = vmatpush1.bf16.msra.mxu0 %v195
    %213 = vmatprep.subr.bf16.mxu0 0
    %214 = vmatpush1.bf16.msra.mxu0 %v196
    %215 = vmatprep.subr.bf16.mxu0 0
    %216 = vmatpush1.bf16.msra.mxu0 %v197
    %217 = vmatprep.subr.bf16.mxu0 0
    %218 = vmatpush1.bf16.msra.mxu0 %v198
    %219 = vmatprep.subr.bf16.mxu0 0
    %220 = vmatpush1.bf16.msra.mxu0 %v199
    %221 = vmatprep.subr.bf16.mxu0 0
    %222 = vmatpush1.bf16.msra.mxu0 %v200
    %223 = vmatprep.subr.bf16.mxu0 0
    %224 = vmatpush1.bf16.msra.mxu0 %v201
    %225 = vmatprep.subr.bf16.mxu0 0
    %226 = vmatpush1.bf16.msra.mxu0 %v202
    %227 = vmatprep.subr.bf16.mxu0 0
    %228 = vmatpush1.bf16.msra.mxu0 0
    %229 = vmatprep.subr.bf16.mxu0 0
    %230 = vmatpush1.bf16.msra.mxu0 0
    %231 = vmatprep.subr.bf16.mxu0 0
    %232 = vmatpush1.bf16.msra.mxu0 0
    %233 = vmatprep.subr.bf16.mxu0 0
    %234 = vmatpush1.bf16.msra.mxu0 0
    %235 = vmatprep.subr.bf16.mxu0 0
    %236 = vmatpush1.bf16.msra.mxu0 0
    %237 = vmatprep.subr.bf16.mxu0 0
    %238 = vmatpush1.bf16.msra.mxu0 0
    %239 = vmatprep.subr.bf16.mxu0 0
    %240 = vmatpush1.bf16.msra.mxu0 0
    %241 = vmatprep.subr.bf16.mxu0 0
    %242 = vmatpush1.bf16.msra.mxu0 0
    %243 = vmatprep.mubr.bf16.mxu0 0
    %244 = vmatmul.mubr.bf16.gmra.mrb[0].mxu0 %v145
    %v245 = vpop.f32.mrb[0].mxu0
    %v246 = vadd.f32 0.0, %v245
    %v247 = vpop.f32.mrb[0].mxu0
    %v248 = vpop.f32.mrb[0].mxu0
    %v249 = vpop.f32.mrb[0].mxu0
    %250 = vdwg.mxu0
    %v251 = vmax.f32 %v246, 0.0
    %v252 = vpack.c.bf16 %v251, %v251
    %s253 = scalar_lea.vmem [#allocation5], 128
    %v254 = vld [vmem:[%s253] sm:$0xf]
    %v255 = vld [vmem:[%s253 + $0x4] sm:$0xf]
    %v256 = vld [vmem:[%s253 + $0x8] sm:$0xf]
    %v257 = vld [vmem:[%s253 + $0xc] sm:$0xf]
    %v258 = vld [vmem:[%s253 + $0x10] sm:$0xf]
    %v259 = vld [vmem:[%s253 + $0x14] sm:$0xf]
    %v260 = vld [vmem:[%s253 + $0x18] sm:$0xf]
    %v261 = vld [vmem:[%s253 + $0x1c] sm:$0xf]
    %v262 = vld [vmem:[%s253 + $0x20] sm:$0xf]
    %v263 = vld [vmem:[%s253 + $0x24] sm:$0xf]
    %v264 = vld [vmem:[%s253 + $0x28] sm:$0xf]
    %v265 = vld [vmem:[%s253 + $0x2c] sm:$0xf]
    %v266 = vld [vmem:[%s253 + $0x30] sm:$0xf]
    %v267 = vld [vmem:[%s253 + $0x34] sm:$0xf]
    %v268 = vld [vmem:[%s253 + $0x38] sm:$0xf]
    %v269 = vld [vmem:[%s253 + $0x3c] sm:$0xf]
    %v286 = vunpack.c.l.b16 %v254
    %v287 = vunpack.c.l.b16 %v255
    %v288 = vunpack.c.l.b16 %v256
    %v289 = vunpack.c.l.b16 %v257
    %v290 = vunpack.c.l.b16 %v258
    %v291 = vunpack.c.l.b16 %v259
    %v292 = vunpack.c.l.b16 %v260
    %v293 = vunpack.c.l.b16 %v261
    %v294 = vunpack.c.l.b16 %v262
    %v295 = vunpack.c.l.b16 %v263
    %v296 = vunpack.c.l.b16 %v264
    %v297 = vunpack.c.l.b16 %v265
    %v298 = vunpack.c.l.b16 %v266
    %v299 = vunpack.c.l.b16 %v267
    %v300 = vunpack.c.l.b16 %v268
    %v301 = vunpack.c.l.b16 %v269
    %v302 = vpack.c.b16 %v287, %v286
    %v303 = vpack.c.b16 %v289, %v288
    %v304 = vpack.c.b16 %v291, %v290
    %v305 = vpack.c.b16 %v293, %v292
    %v306 = vpack.c.b16 %v295, %v294
    %v307 = vpack.c.b16 %v297, %v296
    %v308 = vpack.c.b16 %v299, %v298
    %v309 = vpack.c.b16 %v301, %v300
    %318 = vmatprep.subr.bf16.mxu0 0
    %319 = vmatpush1.bf16.msra.mxu0 %v302
    %320 = vmatprep.subr.bf16.mxu0 0
    %321 = vmatpush1.bf16.msra.mxu0 %v303
    %322 = vmatprep.subr.bf16.mxu0 0
    %323 = vmatpush1.bf16.msra.mxu0 %v304
    %324 = vmatprep.subr.bf16.mxu0 0
    %325 = vmatpush1.bf16.msra.mxu0 %v305
    %326 = vmatprep.subr.bf16.mxu0 0
    %327 = vmatpush1.bf16.msra.mxu0 %v306
    %328 = vmatprep.subr.bf16.mxu0 0
    %329 = vmatpush1.bf16.msra.mxu0 %v307
    %330 = vmatprep.subr.bf16.mxu0 0
    %331 = vmatpush1.bf16.msra.mxu0 %v308
    %332 = vmatprep.subr.bf16.mxu0 0
    %333 = vmatpush1.bf16.msra.mxu0 %v309
    %334 = vmatprep.subr.bf16.mxu0 0
    %335 = vmatpush1.bf16.msra.mxu0 0
    %336 = vmatprep.subr.bf16.mxu0 0
    %337 = vmatpush1.bf16.msra.mxu0 0
    %338 = vmatprep.subr.bf16.mxu0 0
    %339 = vmatpush1.bf16.msra.mxu0 0
    %340 = vmatprep.subr.bf16.mxu0 0
    %341 = vmatpush1.bf16.msra.mxu0 0
    %342 = vmatprep.subr.bf16.mxu0 0
    %343 = vmatpush1.bf16.msra.mxu0 0
    %344 = vmatprep.subr.bf16.mxu0 0
    %345 = vmatpush1.bf16.msra.mxu0 0
    %346 = vmatprep.subr.bf16.mxu0 0
    %347 = vmatpush1.bf16.msra.mxu0 0
    %348 = vmatprep.subr.bf16.mxu0 0
    %349 = vmatpush1.bf16.msra.mxu0 0
    %350 = vmatprep.mubr.bf16.mxu0 0
    %351 = vmatmul.mubr.bf16.gmra.mrb[0].mxu0 %v252
    %v352 = vpop.f32.mrb[0].mxu0
    %v353 = vadd.f32 0.0, %v352
    %v354 = vpop.f32.mrb[0].mxu0
    %v355 = vpop.f32.mrb[0].mxu0
    %v356 = vpop.f32.mrb[0].mxu0
    %357 = vdwg.mxu0
    %v358 = vpack.c.bf16 %v353, %v353
    %s359 = scalar_lea.vmem [#allocation5], 192
    %v360 = vld [vmem:[%s359] sm:$0xf]
    %v361 = vld [vmem:[%s359 + $0x4] sm:$0xf]
    %v362 = vld [vmem:[%s359 + $0x8] sm:$0xf]
    %v363 = vld [vmem:[%s359 + $0xc] sm:$0xf]
    %v364 = vld [vmem:[%s359 + $0x10] sm:$0xf]
    %v365 = vld [vmem:[%s359 + $0x14] sm:$0xf]
    %v366 = vld [vmem:[%s359 + $0x18] sm:$0xf]
    %v367 = vld [vmem:[%s359 + $0x1c] sm:$0xf]
    %v368 = vld [vmem:[%s359 + $0x20] sm:$0xf]
    %v369 = vld [vmem:[%s359 + $0x24] sm:$0xf]
    %v370 = vld [vmem:[%s359 + $0x28] sm:$0xf]
    %v371 = vld [vmem:[%s359 + $0x2c] sm:$0xf]
    %v372 = vld [vmem:[%s359 + $0x30] sm:$0xf]
    %v373 = vld [vmem:[%s359 + $0x34] sm:$0xf]
    %v374 = vld [vmem:[%s359 + $0x38] sm:$0xf]
    %v375 = vld [vmem:[%s359 + $0x3c] sm:$0xf]
    %v392 = vunpack.c.l.b16 %v360
    %v393 = vunpack.c.l.b16 %v361
    %v394 = vunpack.c.l.b16 %v362
    %v395 = vunpack.c.l.b16 %v363
    %v396 = vunpack.c.l.b16 %v364
    %v397 = vunpack.c.l.b16 %v365
    %v398 = vunpack.c.l.b16 %v366
    %v399 = vunpack.c.l.b16 %v367
    %v400 = vunpack.c.l.b16 %v368
    %v401 = vunpack.c.l.b16 %v369
    %v402 = vunpack.c.l.b16 %v370
    %v403 = vunpack.c.l.b16 %v371
    %v404 = vunpack.c.l.b16 %v372
    %v405 = vunpack.c.l.b16 %v373
    %v406 = vunpack.c.l.b16 %v374
    %v407 = vunpack.c.l.b16 %v375
    %v408 = vpack.c.b16 %v393, %v392
    %v409 = vpack.c.b16 %v395, %v394
    %v410 = vpack.c.b16 %v397, %v396
    %v411 = vpack.c.b16 %v399, %v398
    %v412 = vpack.c.b16 %v401, %v400
    %v413 = vpack.c.b16 %v403, %v402
    %v414 = vpack.c.b16 %v405, %v404
    %v415 = vpack.c.b16 %v407, %v406
    %424 = vmatprep.subr.bf16.mxu0 0
    %425 = vmatpush1.bf16.msra.mxu0 %v408
    %426 = vmatprep.subr.bf16.mxu0 0
    %427 = vmatpush1.bf16.msra.mxu0 %v409
    %428 = vmatprep.subr.bf16.mxu0 0
    %429 = vmatpush1.bf16.msra.mxu0 %v410
    %430 = vmatprep.subr.bf16.mxu0 0
    %431 = vmatpush1.bf16.msra.mxu0 %v411
    %432 = vmatprep.subr.bf16.mxu0 0
    %433 = vmatpush1.bf16.msra.mxu0 %v412
    %434 = vmatprep.subr.bf16.mxu0 0
    %435 = vmatpush1.bf16.msra.mxu0 %v413
    %436 = vmatprep.subr.bf16.mxu0 0
    %437 = vmatpush1.bf16.msra.mxu0 %v414
    %438 = vmatprep.subr.bf16.mxu0 0
    %439 = vmatpush1.bf16.msra.mxu0 %v415
    %440 = vmatprep.subr.bf16.mxu0 0
    %441 = vmatpush1.bf16.msra.mxu0 0
    %442 = vmatprep.subr.bf16.mxu0 0
    %443 = vmatpush1.bf16.msra.mxu0 0
    %444 = vmatprep.subr.bf16.mxu0 0
    %445 = vmatpush1.bf16.msra.mxu0 0
    %446 = vmatprep.subr.bf16.mxu0 0
    %447 = vmatpush1.bf16.msra.mxu0 0
    %448 = vmatprep.subr.bf16.mxu0 0
    %449 = vmatpush1.bf16.msra.mxu0 0
    %450 = vmatprep.subr.bf16.mxu0 0
    %451 = vmatpush1.bf16.msra.mxu0 0
    %452 = vmatprep.subr.bf16.mxu0 0
    %453 = vmatpush1.bf16.msra.mxu0 0
    %454 = vmatprep.subr.bf16.mxu0 0
    %455 = vmatpush1.bf16.msra.mxu0 0
    %456 = vmatprep.mubr.bf16.mxu0 0
    %457 = vmatmul.mubr.bf16.gmra.mrb[0].mxu0 %v358
    %v458 = vpop.f32.mrb[0].mxu0
    %v459 = vadd.f32 0.0, %v458
    %v460 = vpop.f32.mrb[0].mxu0
    %v461 = vpop.f32.mrb[0].mxu0
    %v462 = vpop.f32.mrb[0].mxu0
    %463 = vdwg.mxu0
    %v464 = vmax.f32 %v459, 0.0
    %v465 = vpack.c.bf16 %v464, %v464
    %s466 = scalar_lea.vmem [#allocation5], 256
    %v467 = vld [vmem:[%s466] sm:$0xf]
    %v468 = vld [vmem:[%s466 + $0x4] sm:$0xf]
    %v469 = vld [vmem:[%s466 + $0x8] sm:$0xf]
    %v470 = vld [vmem:[%s466 + $0xc] sm:$0xf]
    %v471 = vld [vmem:[%s466 + $0x10] sm:$0xf]
    %v472 = vld [vmem:[%s466 + $0x14] sm:$0xf]
    %v473 = vld [vmem:[%s466 + $0x18] sm:$0xf]
    %v474 = vld [vmem:[%s466 + $0x1c] sm:$0xf]
    %v475 = vld [vmem:[%s466 + $0x20] sm:$0xf]
    %v476 = vld [vmem:[%s466 + $0x24] sm:$0xf]
    %v477 = vld [vmem:[%s466 + $0x28] sm:$0xf]
    %v478 = vld [vmem:[%s466 + $0x2c] sm:$0xf]
    %v479 = vld [vmem:[%s466 + $0x30] sm:$0xf]
    %v480 = vld [vmem:[%s466 + $0x34] sm:$0xf]
    %v481 = vld [vmem:[%s466 + $0x38] sm:$0xf]
    %v482 = vld [vmem:[%s466 + $0x3c] sm:$0xf]
    %v499 = vunpack.c.l.b16 %v467
    %v500 = vunpack.c.l.b16 %v468
    %v501 = vunpack.c.l.b16 %v469
    %v502 = vunpack.c.l.b16 %v470
    %v503 = vunpack.c.l.b16 %v471
    %v504 = vunpack.c.l.b16 %v472
    %v505 = vunpack.c.l.b16 %v473
    %v506 = vunpack.c.l.b16 %v474
    %v507 = vunpack.c.l.b16 %v475
    %v508 = vunpack.c.l.b16 %v476
    %v509 = vunpack.c.l.b16 %v477
    %v510 = vunpack.c.l.b16 %v478
    %v511 = vunpack.c.l.b16 %v479
    %v512 = vunpack.c.l.b16 %v480
    %v513 = vunpack.c.l.b16 %v481
    %v514 = vunpack.c.l.b16 %v482
    %v515 = vpack.c.b16 %v500, %v499
    %v516 = vpack.c.b16 %v502, %v501
    %v517 = vpack.c.b16 %v504, %v503
    %v518 = vpack.c.b16 %v506, %v505
    %v519 = vpack.c.b16 %v508, %v507
    %v520 = vpack.c.b16 %v510, %v509
    %v521 = vpack.c.b16 %v512, %v511
    %v522 = vpack.c.b16 %v514, %v513
    %531 = vmatprep.subr.bf16.mxu0 0
    %532 = vmatpush1.bf16.msra.mxu0 %v515
    %533 = vmatprep.subr.bf16.mxu0 0
    %534 = vmatpush1.bf16.msra.mxu0 %v516
    %535 = vmatprep.subr.bf16.mxu0 0
    %536 = vmatpush1.bf16.msra.mxu0 %v517
    %537 = vmatprep.subr.bf16.mxu0 0
    %538 = vmatpush1.bf16.msra.mxu0 %v518
    %539 = vmatprep.subr.bf16.mxu0 0
    %540 = vmatpush1.bf16.msra.mxu0 %v519
    %541 = vmatprep.subr.bf16.mxu0 0
    %542 = vmatpush1.bf16.msra.mxu0 %v520
    %543 = vmatprep.subr.bf16.mxu0 0
    %544 = vmatpush1.bf16.msra.mxu0 %v521
    %545 = vmatprep.subr.bf16.mxu0 0
    %546 = vmatpush1.bf16.msra.mxu0 %v522
    %547 = vmatprep.subr.bf16.mxu0 0
    %548 = vmatpush1.bf16.msra.mxu0 0
    %549 = vmatprep.subr.bf16.mxu0 0
    %550 = vmatpush1.bf16.msra.mxu0 0
    %551 = vmatprep.subr.bf16.mxu0 0
    %552 = vmatpush1.bf16.msra.mxu0 0
    %553 = vmatprep.subr.bf16.mxu0 0
    %554 = vmatpush1.bf16.msra.mxu0 0
    %555 = vmatprep.subr.bf16.mxu0 0
    %556 = vmatpush1.bf16.msra.mxu0 0
    %557 = vmatprep.subr.bf16.mxu0 0
    %558 = vmatpush1.bf16.msra.mxu0 0
    %559 = vmatprep.subr.bf16.mxu0 0
    %560 = vmatpush1.bf16.msra.mxu0 0
    %561 = vmatprep.subr.bf16.mxu0 0
    %562 = vmatpush1.bf16.msra.mxu0 0
    %563 = vmatprep.mubr.bf16.mxu0 0
    %564 = vmatmul.mubr.bf16.gmra.mrb[0].mxu0 %v465
    %v565 = vpop.f32.mrb[0].mxu0
    %v566 = vadd.f32 0.0, %v565
    %v567 = vpop.f32.mrb[0].mxu0
    %v568 = vpop.f32.mrb[0].mxu0
    %v569 = vpop.f32.mrb[0].mxu0
    %570 = vdwg.mxu0
    %v571 = vmax.f32 %v566, 0.0
    %v572 = vpack.c.bf16 %v571, %v571
    %s573 = scalar_lea.vmem [#allocation5], 320
    %v574 = vld [vmem:[%s573] sm:$0xf]
    %v575 = vld [vmem:[%s573 + $0x4] sm:$0xf]
    %v576 = vld [vmem:[%s573 + $0x8] sm:$0xf]
    %v577 = vld [vmem:[%s573 + $0xc] sm:$0xf]
    %v578 = vld [vmem:[%s573 + $0x10] sm:$0xf]
    %v579 = vld [vmem:[%s573 + $0x14] sm:$0xf]
    %v580 = vld [vmem:[%s573 + $0x18] sm:$0xf]
    %v581 = vld [vmem:[%s573 + $0x1c] sm:$0xf]
    %v582 = vld [vmem:[%s573 + $0x20] sm:$0xf]
    %v583 = vld [vmem:[%s573 + $0x24] sm:$0xf]
    %v584 = vld [vmem:[%s573 + $0x28] sm:$0xf]
    %v585 = vld [vmem:[%s573 + $0x2c] sm:$0xf]
    %v586 = vld [vmem:[%s573 + $0x30] sm:$0xf]
    %v587 = vld [vmem:[%s573 + $0x34] sm:$0xf]
    %v588 = vld [vmem:[%s573 + $0x38] sm:$0xf]
    %v589 = vld [vmem:[%s573 + $0x3c] sm:$0xf]
    %v606 = vunpack.c.l.b16 %v574
    %v607 = vunpack.c.l.b16 %v575
    %v608 = vunpack.c.l.b16 %v576
    %v609 = vunpack.c.l.b16 %v577
    %v610 = vunpack.c.l.b16 %v578
    %v611 = vunpack.c.l.b16 %v579
    %v612 = vunpack.c.l.b16 %v580
    %v613 = vunpack.c.l.b16 %v581
    %v614 = vunpack.c.l.b16 %v582
    %v615 = vunpack.c.l.b16 %v583
    %v616 = vunpack.c.l.b16 %v584
    %v617 = vunpack.c.l.b16 %v585
    %v618 = vunpack.c.l.b16 %v586
    %v619 = vunpack.c.l.b16 %v587
    %v620 = vunpack.c.l.b16 %v588
    %v621 = vunpack.c.l.b16 %v589
    %v622 = vpack.c.b16 %v607, %v606
    %v623 = vpack.c.b16 %v609, %v608
    %v624 = vpack.c.b16 %v611, %v610
    %v625 = vpack.c.b16 %v613, %v612
    %v626 = vpack.c.b16 %v615, %v614
    %v627 = vpack.c.b16 %v617, %v616
    %v628 = vpack.c.b16 %v619, %v618
    %v629 = vpack.c.b16 %v621, %v620
    %638 = vmatprep.subr.bf16.mxu0 0
    %639 = vmatpush1.bf16.msra.mxu0 %v622
    %640 = vmatprep.subr.bf16.mxu0 0
    %641 = vmatpush1.bf16.msra.mxu0 %v623
    %642 = vmatprep.subr.bf16.mxu0 0
    %643 = vmatpush1.bf16.msra.mxu0 %v624
    %644 = vmatprep.subr.bf16.mxu0 0
    %645 = vmatpush1.bf16.msra.mxu0 %v625
    %646 = vmatprep.subr.bf16.mxu0 0
    %647 = vmatpush1.bf16.msra.mxu0 %v626
    %648 = vmatprep.subr.bf16.mxu0 0
    %649 = vmatpush1.bf16.msra.mxu0 %v627
    %650 = vmatprep.subr.bf16.mxu0 0
    %651 = vmatpush1.bf16.msra.mxu0 %v628
    %652 = vmatprep.subr.bf16.mxu0 0
    %653 = vmatpush1.bf16.msra.mxu0 %v629
    %654 = vmatprep.subr.bf16.mxu0 0
    %655 = vmatpush1.bf16.msra.mxu0 0
    %656 = vmatprep.subr.bf16.mxu0 0
    %657 = vmatpush1.bf16.msra.mxu0 0
    %658 = vmatprep.subr.bf16.mxu0 0
    %659 = vmatpush1.bf16.msra.mxu0 0
    %660 = vmatprep.subr.bf16.mxu0 0
    %661 = vmatpush1.bf16.msra.mxu0 0
    %662 = vmatprep.subr.bf16.mxu0 0
    %663 = vmatpush1.bf16.msra.mxu0 0
    %664 = vmatprep.subr.bf16.mxu0 0
    %665 = vmatpush1.bf16.msra.mxu0 0
    %666 = vmatprep.subr.bf16.mxu0 0
    %667 = vmatpush1.bf16.msra.mxu0 0
    %668 = vmatprep.subr.bf16.mxu0 0
    %669 = vmatpush1.bf16.msra.mxu0 0
    %670 = vmatprep.mubr.bf16.mxu0 0
    %671 = vmatmul.mubr.bf16.gmra.mrb[0].mxu0 %v572
    %v672 = vpop.f32.mrb[0].mxu0
    %v673 = vadd.f32 0.0, %v672
    %v674 = vpop.f32.mrb[0].mxu0
    %v675 = vpop.f32.mrb[0].mxu0
    %v676 = vpop.f32.mrb[0].mxu0
    %677 = vdwg.mxu0
    %678 = vst [vmem:[#allocation7] sm:$0xff] %v673
    // Predicated region
    $region18: #{tpu_custom_call.1} parent=1 // pred_check
      _
    $region19: #{tpu_custom_call.1} parent=1 // pred_check_branch
      %680 = sbr.rel (0) target = $region21
    $region20: #{tpu_custom_call.1} parent=1 // pred_region
      %s682 = ssub.s32 128, 128
      %683 = vsyncadd [#allocation4], %s682
      %s685 = sshll.u32 [#allocation7], 4
      %s686 = int_to_ptr.vmem [resolvable:$true] %s685
      %688 = dma.vmem_to_hbm [thread:$0]  %s686, 128, %s2, [#allocation4]
    $region21: #{tpu_custom_call.1} parent=1 // pred_fallthru
      _
    // Predicated region
    $region22: #{tpu_custom_call.1} parent=1 // pred_check
      _
    $region23: #{tpu_custom_call.1} parent=1 // pred_check_branch
      %690 = sbr.rel (0) target = $region25
    $region24: #{tpu_custom_call.1} parent=1 // pred_region
      %691 = dma.done [#allocation4], 128
    $region25: #{tpu_custom_call.1} parent=1 // pred_fallthru
      _
    %692 = vsyncpa [#allocation3], 1
    %693 = vsyncpa [#allocation6], 1
    %694 = vsyncpa [#allocation4], 1

</llo_original>
